<compile_context>
chip_gen: v5e
topology: v5e:2x2
jax: 0.10.0
libtpu: 0.0.40
codegen_flags: <defaults>
</compile_context>

<pallas_src>
import jax
import jax.numpy as jnp
from jax.experimental import pallas as pl
from jax.experimental.pallas import tpu as pltpu


def _pick_t_tile(T, H, elem_bytes, target_block_bytes):
    """Largest divisor of T keeping one (t_tile, H) block under the byte budget,
    preferring multiples of 8 (sublane-aligned -> VPU-only grouped reduce)."""
    max_rows = max(1, target_block_bytes // max(1, H * elem_bytes))
    best_any, best_mult8 = 1, 0
    d = 1
    while d * d <= T:
        if T % d == 0:
            for cand in (d, T // d):
                if cand <= max_rows:
                    best_any = max(best_any, cand)
                    if cand % 8 == 0:
                        best_mult8 = max(best_mult8, cand)
        d += 1
    return best_mult8 if best_mult8 else best_any


def _make_artar_kernel(t_tile, n_t, acc_rows, H):
    def kernel(h_ref, out_ref, ar_acc, tar_acc, corr_acc, prev_ref):
        t = pl.program_id(1)

        h = h_ref[...].astype(jnp.float32)        # (t_tile, H)
        first = h[0:1, :]                         # (1, H) single-row extracts
        last = h[t_tile - 1:t_tile, :]            # (1, H)

        @pl.when(t == 0)
        def _init():
            ar_acc[...] = jnp.zeros_like(ar_acc)
            tar_acc[...] = jnp.zeros_like(tar_acc)
            corr_acc[...] = jnp.zeros_like(corr_acc)
            # Seed the carried row with this tile's first row so the boundary
            # diff of the first tile is exactly zero.
            prev_ref[...] = first

        prev = prev_ref[...]                      # (1, H)

        # ---- AR: sum of squares; grouped partial reduce is pure VPU adds. ----
        hsq = h * h
        if acc_rows == 8:
            ar_acc[...] += hsq.reshape(t_tile // 8, 8, H).sum(axis=0)
        else:  # t_tile not a multiple of 8 (then t_tile == T): small fallback
            ar_acc[...] += hsq.sum(axis=0, keepdims=True)

        # ---- TAR: temporal first difference via XLU sublane roll. ----------
        if t_tile > 1:
            d = h - pltpu.roll(h, shift=1, axis=0)   # cyclic consecutive diff
            dsq = d * d
            if acc_rows == 8:
                tar_acc[...] += dsq.reshape(t_tile // 8, 8, H).sum(axis=0)
            else:
                tar_acc[...] += dsq.sum(axis=0, keepdims=True)
            wrap = first - last                   # the wrapped (invalid) row
            bound = prev - first                  # cross-tile boundary row
            corr_acc[...] += bound * bound - wrap * wrap
        else:
            bound = prev - first
            corr_acc[...] += bound * bound

        prev_ref[...] = last                      # carry for the next T tile

        # ---- Finalize once per batch row: one cross-lane reduce + store. ----
        @pl.when(t == n_t - 1)
        def _finish():
            ar_ssq = jnp.sum(ar_acc[...])
            tar_ssq = jnp.sum(tar_acc[...]) + jnp.sum(corr_acc[...])
            lane = jax.lax.broadcasted_iota(jnp.int32, (1, 1, 128), 2)
            out_ref[...] = jnp.where(
                lane == 0, ar_ssq, jnp.where(lane == 1, tar_ssq, 0.0)
            ).astype(jnp.float32)

    return kernel


def artar(hidden, alpha=2.0, beta=1.0, *, t_tile=None,
          target_block_bytes=4 * 1024 * 1024):
    """alpha * ||hidden||_F + beta * ||hidden[:, :-1] - hidden[:, 1:]||_F."""
    B, T, H = hidden.shape
    elem_bytes = jnp.dtype(hidden.dtype).itemsize
    if t_tile is None:
        # Note: for extremely large H a third grid axis over H could be added;
        # typical LM hidden sizes fit a (t_tile, H) block comfortably.
        t_tile = _pick_t_tile(T, H, elem_bytes, target_block_bytes)
    assert T % t_tile == 0, (T, t_tile)
    n_t = T // t_tile
    acc_rows = 8 if t_tile % 8 == 0 else 1

    partials = pl.pallas_call(
        _make_artar_kernel(t_tile, n_t, acc_rows, H),
        out_shape=jax.ShapeDtypeStruct((B, 1, 128), jnp.float32),
        grid=(B, n_t),
        in_specs=[
            pl.BlockSpec((None, t_tile, H), lambda b, t: (b, t, 0)),
        ],
        # Lane-dense per-batch partials (full 128-lane row, unmasked store).
        out_specs=pl.BlockSpec((1, 1, 128), lambda b, t: (b, 0, 0)),
        scratch_shapes=[
            pltpu.VMEM((acc_rows, H), jnp.float32),   # AR  partial accumulator
            pltpu.VMEM((acc_rows, H), jnp.float32),   # TAR partial accumulator
            pltpu.VMEM((1, H), jnp.float32),          # wrap/boundary correction
            pltpu.VMEM((1, H), jnp.float32),          # carried last row of prev tile
        ],
        compiler_params=pltpu.CompilerParams(
            # batch: independent per-row partials -> megacore-shardable (v7x);
            # T: serial reduction axis carrying the accumulators.
            dimension_semantics=("parallel", "arbitrary"),
        ),
    )(hidden)

    ar_ssq = jnp.sum(partials[:, 0, 0])
    tar_ssq = jnp.maximum(jnp.sum(partials[:, 0, 1]), 0.0)  # guard fp cancellation
    return alpha * jnp.sqrt(ar_ssq) + beta * jnp.sqrt(tar_ssq)


def _reference(hidden, alpha, beta):
    ar = jnp.linalg.norm(hidden.reshape(-1))
    tar = jnp.linalg.norm((hidden[:, :-1, :] - hidden[:, 1:, :]).reshape(-1))
    return alpha * ar + beta * tar


if __name__ == "__main__":
    key = jax.random.PRNGKey(0)

    # Small shape implied by the module (batch, seq, hidden).
    B, T, H = 2, 8, 32
    hidden = jax.random.normal(key, (B, T, H), dtype=jnp.float32)
    out = jax.block_until_ready(artar(hidden, alpha=2.0, beta=1.0))
    ref = _reference(hidden, 2.0, 1.0)
    assert jnp.allclose(out, ref, rtol=1e-5, atol=1e-5), (out, ref)

    # Multi-tile case: exercises the T tiling + carried boundary row.
    B2, T2, H2 = 2, 32, 32
    hidden2 = jax.random.normal(jax.random.PRNGKey(0), (B2, T2, H2), jnp.float32)
    out2 = jax.block_until_ready(artar(hidden2, alpha=2.0, beta=1.0, t_tile=8))
    ref2 = _reference(hidden2, 2.0, 1.0)
    assert jnp.allclose(out2, ref2, rtol=1e-5, atol=1e-5), (out2, ref2)

    print("KERNEL_OK")
</pallas_src>

<mosaic_0001>
module attributes {stable_mosaic.version = 11 : i64} {
  func.func @kernel(%arg0: i32, %arg1: i32, %arg2: memref<1x8x32xf32, #tpu.memory_space<vmem>>, %arg3: memref<1x1x128xf32, #tpu.memory_space<vmem>>, %arg4: memref<8x32xf32, #tpu.memory_space<vmem>>, %arg5: memref<8x32xf32, #tpu.memory_space<vmem>>, %arg6: memref<1x32xf32, #tpu.memory_space<vmem>>, %arg7: memref<1x32xf32, #tpu.memory_space<vmem>>) attributes {dimension_semantics = [#tpu.dimension_semantics<parallel>, #tpu.dimension_semantics<arbitrary>], iteration_bounds = array<i64: 2, 1>, scalar_prefetch = 0 : i64, scratch_operands = 4 : i64, tpu.core_type = #tpu.core_type<tc>, window_params = [{transform_indices = @transform_0, window_bounds = array<i64: 1, 8, 32>}, {transform_indices = @transform_1, window_bounds = array<i64: 1, 1, 128>}]} {
    %c0 = arith.constant 0 : index
    %c0_0 = arith.constant 0 : index
    %c0_1 = arith.constant 0 : index
    %0 = vector.load %arg2[%c0, %c0_0, %c0_1] : memref<1x8x32xf32, #tpu.memory_space<vmem>>, vector<1x8x32xf32>
    %1 = vector.shape_cast %0 : vector<1x8x32xf32> to vector<8x32xf32>
    %2 = vector.extract_strided_slice %1 {offsets = [0, 0], sizes = [1, 32], strides = [1, 1]} : vector<8x32xf32> to vector<1x32xf32>
    %3 = vector.extract_strided_slice %1 {offsets = [7, 0], sizes = [1, 32], strides = [1, 1]} : vector<8x32xf32> to vector<1x32xf32>
    %c0_i32 = arith.constant 0 : i32
    %4 = arith.cmpi eq, %arg1, %c0_i32 : i32
    %5 = arith.extui %4 : i1 to i32
    %c0_i32_2 = arith.constant 0 : i32
    %6 = arith.cmpi ne, %5, %c0_i32_2 : i32
    scf.if %6 {
      %cst_22 = arith.constant 0.000000e+00 : f32
      %34 = vector.broadcast %cst_22 : f32 to vector<8x32xf32>
      %c0_23 = arith.constant 0 : index
      %c0_24 = arith.constant 0 : index
      %35 = vector.load %arg4[%c0_23, %c0_24] : memref<8x32xf32, #tpu.memory_space<vmem>>, vector<8x32xf32>
      tpu.vector_store %arg4[%c0_23, %c0_24], %34 {strides = array<i32>} : memref<8x32xf32, #tpu.memory_space<vmem>>, vector<8x32xf32>,
      %cst_25 = arith.constant 0.000000e+00 : f32
      %36 = vector.broadcast %cst_25 : f32 to vector<8x32xf32>
      %c0_26 = arith.constant 0 : index
      %c0_27 = arith.constant 0 : index
      %37 = vector.load %arg5[%c0_26, %c0_27] : memref<8x32xf32, #tpu.memory_space<vmem>>, vector<8x32xf32>
      tpu.vector_store %arg5[%c0_26, %c0_27], %36 {strides = array<i32>} : memref<8x32xf32, #tpu.memory_space<vmem>>, vector<8x32xf32>,
      %cst_28 = arith.constant 0.000000e+00 : f32
      %38 = vector.broadcast %cst_28 : f32 to vector<1x32xf32>
      %c0_29 = arith.constant 0 : index
      %c0_30 = arith.constant 0 : index
      %39 = vector.load %arg6[%c0_29, %c0_30] : memref<1x32xf32, #tpu.memory_space<vmem>>, vector<1x32xf32>
      tpu.vector_store %arg6[%c0_29, %c0_30], %38 {strides = array<i32>} : memref<1x32xf32, #tpu.memory_space<vmem>>, vector<1x32xf32>,
      %c0_31 = arith.constant 0 : index
      %c0_32 = arith.constant 0 : index
      %40 = vector.load %arg7[%c0_31, %c0_32] : memref<1x32xf32, #tpu.memory_space<vmem>>, vector<1x32xf32>
      tpu.vector_store %arg7[%c0_31, %c0_32], %2 {strides = array<i32>} : memref<1x32xf32, #tpu.memory_space<vmem>>, vector<1x32xf32>,
    } else {
    }
    %c0_3 = arith.constant 0 : index
    %c0_4 = arith.constant 0 : index
    %7 = vector.load %arg7[%c0_3, %c0_4] : memref<1x32xf32, #tpu.memory_space<vmem>>, vector<1x32xf32>
    %8 = arith.mulf %1, %1 : vector<8x32xf32>
    %c0_5 = arith.constant 0 : index
    %c0_6 = arith.constant 0 : index
    %9 = vector.load %arg4[%c0_5, %c0_6] : memref<8x32xf32, #tpu.memory_space<vmem>>, vector<8x32xf32>
    %10 = vector.shape_cast %8 : vector<8x32xf32> to vector<1x8x32xf32>
    %cst = arith.constant dense<0.000000e+00> : vector<8x32xf32>
    %11 = vector.multi_reduction <add>, %10, %cst [0] : vector<1x8x32xf32> to vector<8x32xf32>
    %12 = arith.addf %9, %11 : vector<8x32xf32>
    %c0_7 = arith.constant 0 : index
    %c0_8 = arith.constant 0 : index
    %13 = vector.load %arg4[%c0_7, %c0_8] : memref<8x32xf32, #tpu.memory_space<vmem>>, vector<8x32xf32>
    tpu.vector_store %arg4[%c0_7, %c0_8], %12 {strides = array<i32>} : memref<8x32xf32, #tpu.memory_space<vmem>>, vector<8x32xf32>,
    %c1_i32 = arith.constant 1 : i32
    %14 = tpu.dynamic_rotate %1 by %c1_i32 dim 0 : vector<8x32xf32>, i32 -> vector<8x32xf32>
    %15 = arith.subf %1, %14 : vector<8x32xf32>
    %16 = arith.mulf %15, %15 : vector<8x32xf32>
    %c0_9 = arith.constant 0 : index
    %c0_10 = arith.constant 0 : index
    %17 = vector.load %arg5[%c0_9, %c0_10] : memref<8x32xf32, #tpu.memory_space<vmem>>, vector<8x32xf32>
    %18 = vector.shape_cast %16 : vector<8x32xf32> to vector<1x8x32xf32>
    %cst_11 = arith.constant dense<0.000000e+00> : vector<8x32xf32>
    %19 = vector.multi_reduction <add>, %18, %cst_11 [0] : vector<1x8x32xf32> to vector<8x32xf32>
    %20 = arith.addf %17, %19 : vector<8x32xf32>
    %c0_12 = arith.constant 0 : index
    %c0_13 = arith.constant 0 : index
    %21 = vector.load %arg5[%c0_12, %c0_13] : memref<8x32xf32, #tpu.memory_space<vmem>>, vector<8x32xf32>
    tpu.vector_store %arg5[%c0_12, %c0_13], %20 {strides = array<i32>} : memref<8x32xf32, #tpu.memory_space<vmem>>, vector<8x32xf32>,
    %22 = arith.subf %2, %3 : vector<1x32xf32>
    %23 = arith.subf %7, %2 : vector<1x32xf32>
    %c0_14 = arith.constant 0 : index
    %c0_15 = arith.constant 0 : index
    %24 = vector.load %arg6[%c0_14, %c0_15] : memref<1x32xf32, #tpu.memory_space<vmem>>, vector<1x32xf32>
    %25 = arith.mulf %23, %23 : vector<1x32xf32>
    %26 = arith.mulf %22, %22 : vector<1x32xf32>
    %27 = arith.subf %25, %26 : vector<1x32xf32>
    %28 = arith.addf %24, %27 : vector<1x32xf32>
    %c0_16 = arith.constant 0 : index
    %c0_17 = arith.constant 0 : index
    %29 = vector.load %arg6[%c0_16, %c0_17] : memref<1x32xf32, #tpu.memory_space<vmem>>, vector<1x32xf32>
    tpu.vector_store %arg6[%c0_16, %c0_17], %28 {strides = array<i32>} : memref<1x32xf32, #tpu.memory_space<vmem>>, vector<1x32xf32>,
    %c0_18 = arith.constant 0 : index
    %c0_19 = arith.constant 0 : index
    %30 = vector.load %arg7[%c0_18, %c0_19] : memref<1x32xf32, #tpu.memory_space<vmem>>, vector<1x32xf32>
    tpu.vector_store %arg7[%c0_18, %c0_19], %3 {strides = array<i32>} : memref<1x32xf32, #tpu.memory_space<vmem>>, vector<1x32xf32>,
    %c0_i32_20 = arith.constant 0 : i32
    %31 = arith.cmpi eq, %arg1, %c0_i32_20 : i32
    %32 = arith.extui %31 : i1 to i32
    %c0_i32_21 = arith.constant 0 : i32
    %33 = arith.cmpi ne, %32, %c0_i32_21 : i32
    scf.if %33 {
      %c0_22 = arith.constant 0 : index
      %c0_23 = arith.constant 0 : index
      %34 = vector.load %arg4[%c0_22, %c0_23] : memref<8x32xf32, #tpu.memory_space<vmem>>, vector<8x32xf32>
      %35 = vector.shape_cast %34 : vector<8x32xf32> to vector<1x8x32xf32>
      %cst_24 = arith.constant dense<0.000000e+00> : vector<1xf32>
      %36 = vector.multi_reduction <add>, %35, %cst_24 [1, 2] : vector<1x8x32xf32> to vector<1xf32>
      %37 = vector.shape_cast %36 : vector<1xf32> to vector<1x1x1xf32>
      %38 = vector.extract %37[0, 0, 0] : f32 from vector<1x1x1xf32>
      %c0_25 = arith.constant 0 : index
      %c0_26 = arith.constant 0 : index
      %39 = vector.load %arg5[%c0_25, %c0_26] : memref<8x32xf32, #tpu.memory_space<vmem>>, vector<8x32xf32>
      %40 = vector.shape_cast %39 : vector<8x32xf32> to vector<1x8x32xf32>
      %cst_27 = arith.constant dense<0.000000e+00> : vector<1xf32>
      %41 = vector.multi_reduction <add>, %40, %cst_27 [1, 2] : vector<1x8x32xf32> to vector<1xf32>
      %42 = vector.shape_cast %41 : vector<1xf32> to vector<1x1x1xf32>
      %43 = vector.extract %42[0, 0, 0] : f32 from vector<1x1x1xf32>
      %c0_28 = arith.constant 0 : index
      %c0_29 = arith.constant 0 : index
      %44 = vector.load %arg6[%c0_28, %c0_29] : memref<1x32xf32, #tpu.memory_space<vmem>>, vector<1x32xf32>
      %45 = vector.shape_cast %44 : vector<1x32xf32> to vector<1x1x32xf32>
      %cst_30 = arith.constant dense<0.000000e+00> : vector<1xf32>
      %46 = vector.multi_reduction <add>, %45, %cst_30 [1, 2] : vector<1x1x32xf32> to vector<1xf32>
      %47 = vector.shape_cast %46 : vector<1xf32> to vector<1x1x1xf32>
      %48 = vector.extract %47[0, 0, 0] : f32 from vector<1x1x1xf32>
      %49 = arith.addf %43, %48 : f32
      %50 = tpu.iota {dimensions = array<i32: 2>} : vector<1x1x128xi32>
      %c0_i32_31 = arith.constant 0 : i32
      %51 = vector.broadcast %c0_i32_31 : i32 to vector<1x1x128xi32>
      %52 = arith.cmpi eq, %50, %51 : vector<1x1x128xi32>
      %c1_i32_32 = arith.constant 1 : i32
      %53 = vector.broadcast %c1_i32_32 : i32 to vector<1x1x128xi32>
      %54 = arith.cmpi eq, %50, %53 : vector<1x1x128xi32>
      %cst_33 = arith.constant 0.000000e+00 : f32
      %55 = vector.broadcast %49 : f32 to vector<1x1x128xf32>
      %56 = vector.broadcast %cst_33 : f32 to vector<1x1x128xf32>
      %57 = arith.select %54, %55, %56 : vector<1x1x128xi1>, vector<1x1x128xf32>
      %58 = vector.broadcast %38 : f32 to vector<1x1x128xf32>
      %59 = arith.select %52, %58, %57 : vector<1x1x128xi1>, vector<1x1x128xf32>
      %c0_34 = arith.constant 0 : index
      %c0_35 = arith.constant 0 : index
      %c0_36 = arith.constant 0 : index
      %60 = vector.load %arg3[%c0_34, %c0_35, %c0_36] : memref<1x1x128xf32, #tpu.memory_space<vmem>>, vector<1x1x128xf32>
      tpu.vector_store %arg3[%c0_34, %c0_35, %c0_36], %59 {strides = array<i32>} : memref<1x1x128xf32, #tpu.memory_space<vmem>>, vector<1x1x128xf32>,
    } else {
    }
    return
  }
  func.func @transform_0(%arg0: i32, %arg1: i32) -> (i32, i32, i32) {
    %c0_i32 = arith.constant 0 : i32
    %c0_i32_0 = arith.constant 0 : i32
    return %arg0, %arg1, %c0_i32 : i32, i32, i32
  }
  func.func @transform_1(%arg0: i32, %arg1: i32) -> (i32, i32, i32) {
    %c0_i32 = arith.constant 0 : i32
    %c0_i32_0 = arith.constant 0 : i32
    %c0_i32_1 = arith.constant 0 : i32
    return %arg0, %c0_i32, %c0_i32_0 : i32, i32, i32
  }
}

</mosaic_0001>

<llo_original>
// kernel: tpu_custom_call.1
$region0: #{tpu_custom_call.1}
  #allocation0 [shape = 'u32[]', space=smem, size = 0x4, offset = 0x4, fixed_abs, tag = 'smem constant byte address 0x4 - core index']
  #allocation1 [shape = 'u32[72,128]{1,0:T(1,128)}', space=vmem, size = 0x9000, scoped, tag = 'internal scratch']
  #allocation2 [shape = 'f32[8,32]{1,0:T(8,128)}', space=vmem, size = 0x1000, scoped, tag = 'scratch operand']
  #allocation3 [shape = 'f32[8,32]{1,0:T(8,128)}', space=vmem, size = 0x1000, scoped, tag = 'scratch operand']
  #allocation4 [shape = 'f32[1,32]{1,0:T(1,128)}', space=vmem, size = 0x200, scoped, tag = 'scratch operand']
  #allocation5 [shape = 'f32[1,32]{1,0:T(1,128)}', space=vmem, size = 0x200, scoped, tag = 'scratch operand']
  %s0 = inlined_call_operand.hbm [shape: f32[2,8,32], index: 0, kind: input, shape index: {}]
  %s1 = inlined_call_operand.hbm [shape: f32[2,1,128], index: 1, kind: output, shape index: {}]
  %s2 = sld [smem:[#allocation0]]
  $region49: #{tpu_custom_call.1} parent=0
    _
  %s4 = ssub.s32 1, %s2
  %s5 = scalar_select 0, %s4, %s2
  $region1: #{tpu_custom_call.1} parent=0
    #allocation6 [shape = 'u8[8192]{0}', space=vmem, size = 0x2000, scoped, tag = 'input window, operand 0']
    #allocation7 [shape = 's32[2]{0}', space=sflag, size = 0x8, scoped, tag = 'scoped memory for tpu_custom_call.1']
    #allocation8 [shape = 's32[2]{0}', space=sflag, size = 0x8, scoped, tag = 'scoped memory for tpu_custom_call.1']
    #allocation9 [shape = 'u8[1024]{0}', space=vmem, size = 0x400, scoped, tag = 'output window, operand 0']
    %6 = vsyncpa [#allocation7], 0
    %s7 = scalar_lea.sflag [#allocation7], 1
    %8 = vsyncpa %s7, 0
    %9 = vsyncpa [#allocation8], 0
    %s10 = scalar_lea.sflag [#allocation8], 1
    %11 = vsyncpa %s10, 0
    loop: start=0, step=1, limit=4
    $region2: #{tpu_custom_call.1} parent=1 // loop_pre_header
      _
    $region3: #{tpu_custom_call.1} parent=1 // loop_header
      %s13 = sphi 0, %s17
      %p14 = scmp.ge.s32.totalorder %s13, 4
      %s20 = sphi 0, %s32
      %s21 = sphi 0, %s28
      %s22 = sphi 0, %s20
      %s23 = sphi 0, %s21
      %s24 = sphi 0, %s22
      %s25 = sphi 0, %s23
      %s37 = sphi 0, %s39
      %s40 = sphi 0, %s37
      %s41 = sphi 0, %s40
      %s57 = sphi 0, %s41
      %s63 = sphi 0, %s65
      %s66 = sphi 0, %s63
      %s67 = sphi 0, %s66
      %s83 = sphi 0, %s67
    $region4: #{tpu_custom_call.1} parent=1 // loop_header_branch
      %16 = sbr.rel (%p14) target = $region8
    $region5: #{tpu_custom_call.1} parent=1 // loop_body
      %s18 = ssub.s32 %s13, 1
      %s19 = ssub.s32 %s13, 2
      %s26 = sadd.s32 1, %s21
      %p27 = scmp.ge.s32.totalorder %s26, 1
      %s28 = scalar_select %p27, 0, %s26
      %s29 = sadd.s32 1, %s20
      %s30 = scalar_select %p27, %s29, %s20
      %p31 = scmp.ge.s32.totalorder %s30, 2
      %s32 = scalar_select %p31, 0, %s30
      %s33 = ssub.s32 %s20, %s32
      %s34 = ssub.s32 %s21, %s28
      %s35 = sor.u32 %s33, %s34
      %p36 = scmp.eq.s32.totalorder %s35, 0
      %s38 = sadd.s32 %s37, 1
      %s39 = scalar_select %p36, %s37, %s38
      %p42 = pneg %p36
      %p43 = scmp.eq.s32.totalorder %s13, 1
      %p44 = por %p42, %p43
      %p45 = scmp.ne.s32.totalorder %s37, %s40
      %p46 = scmp.eq.s32.totalorder %s13, 0
      %p47 = por %p45, %p46
      %p48 = scmp.ne.s32.totalorder %s37, %s40
      %p49 = scmp.eq.s32.totalorder %s18, 1
      %p50 = por %p48, %p49
      %p51 = scmp.ne.s32.totalorder %s40, %s41
      %p52 = scmp.eq.s32.totalorder %s18, 0
      %p53 = por %p51, %p52
      %p54 = scmp.ne.s32.totalorder %s40, %s41
      %p55 = scmp.eq.s32.totalorder %s19, 1
      %p56 = por %p54, %p55
      %p58 = scmp.ne.s32.totalorder %s41, %s57
      %p59 = scmp.eq.s32.totalorder %s19, 0
      %p60 = por %p58, %p59
      %s61 = ssub.s32 %s20, %s32
      %p62 = scmp.eq.s32.totalorder %s61, 0
      %s64 = sadd.s32 %s63, 1
      %s65 = scalar_select %p62, %s63, %s64
      %p68 = pneg %p62
      %p69 = scmp.eq.s32.totalorder %s13, 1
      %p70 = por %p68, %p69
      %p71 = scmp.ne.s32.totalorder %s63, %s66
      %p72 = scmp.eq.s32.totalorder %s13, 0
      %p73 = por %p71, %p72
      %p74 = scmp.ne.s32.totalorder %s63, %s66
      %p75 = scmp.eq.s32.totalorder %s18, 1
      %p76 = por %p74, %p75
      %p77 = scmp.ne.s32.totalorder %s66, %s67
      %p78 = scmp.eq.s32.totalorder %s18, 0
      %p79 = por %p77, %p78
      %p80 = scmp.ne.s32.totalorder %s66, %s67
      %p81 = scmp.eq.s32.totalorder %s19, 1
      %p82 = por %p80, %p81
      %p84 = scmp.ne.s32.totalorder %s67, %s83
      %p85 = scmp.eq.s32.totalorder %s19, 0
      %p86 = por %p84, %p85
      %p87 = scmp.le.s32.totalorder 1, %s13
      %p88 = scmp.lt.s32.totalorder %s13, 3
      %p89 = pnand %p87, %p88
      %p90 = pneg %p89
      // Predicated region
      $region9: #{tpu_custom_call.1} parent=5 // pred_check
        _
      $region10: #{tpu_custom_call.1} parent=5 // pred_check_branch
        %92 = sbr.rel (%p89) target = $region12
      $region11: #{tpu_custom_call.1} parent=5 // pred_region
        %s93 = ssub.s32 %s13, 1
      $region12: #{tpu_custom_call.1} parent=5 // pred_fallthru
        _
      %p94 = scmp.lt.s32.totalorder %s13, 2
      // Predicated region
      $region13: #{tpu_custom_call.1} parent=5 // pred_check
        %p95 = pneg %p94
      $region14: #{tpu_custom_call.1} parent=5 // pred_check_branch
        %97 = sbr.rel (%p95) target = $region16
      $region15: #{tpu_custom_call.1} parent=5 // pred_region
        // Predicated region
        $region17: #{tpu_custom_call.1} parent=15 // pred_check
          %p98 = pneg %p47
        $region18: #{tpu_custom_call.1} parent=15 // pred_check_branch
          %100 = sbr.rel (%p98) target = $region20
        $region19: #{tpu_custom_call.1} parent=15 // pred_region
          %s101 = sand.u32 %s37, 1
          %s102 = scalar_lea.sflag [#allocation7], %s101
          %s103 = sand.u32 %s37, 1
          %s104 = smul.addr %s103, 8
          %s105 = scalar_lea.vmem [#allocation6], %s104
          %107 = vsyncadd %s102, 0
          %s108 = sadd.s32 %s21, %s20
          %s109 = smul.addr %s108, 8
          %s110 = scalar_lea.hbm %s0, %s109
          %s112 = sshll.u32 %s110, 4
          %s113 = int_to_ptr.hbm [resolvable:$true] %s112
          %s114 = sshll.u32 %s105, 4
          %s115 = int_to_ptr.vmem [resolvable:$true] %s114
          %117 = dma.hbm_to_vmem [thread:$0]  %s113, 128, %s115, %s102
        $region20: #{tpu_custom_call.1} parent=15 // pred_fallthru
          _
      $region16: #{tpu_custom_call.1} parent=5 // pred_fallthru
        _
      %p118 = scmp.le.s32.totalorder 1, %s13
      %p119 = scmp.lt.s32.totalorder %s13, 3
      %p120 = pnand %p118, %p119
      %p121 = pneg %p120
      // Predicated region
      $region21: #{tpu_custom_call.1} parent=5 // pred_check
        _
      $region22: #{tpu_custom_call.1} parent=5 // pred_check_branch
        %123 = sbr.rel (%p120) target = $region24
      $region23: #{tpu_custom_call.1} parent=5 // pred_region
        %s124 = ssub.s32 %s13, 1
        %s125 = sand.u32 %s40, 1
        %s126 = scalar_lea.sflag [#allocation7], %s125
        %s127 = sand.u32 %s40, 1
        %s128 = smul.addr %s127, 8
        %s129 = scalar_lea.vmem [#allocation6], %s128
        // Predicated region
        $region25: #{tpu_custom_call.1} parent=23 // pred_check
          %p130 = pneg %p53
        $region26: #{tpu_custom_call.1} parent=23 // pred_check_branch
          %132 = sbr.rel (%p130) target = $region28
        $region27: #{tpu_custom_call.1} parent=23 // pred_region
          %134 = dma.done %s126, 128
        $region28: #{tpu_custom_call.1} parent=23 // pred_fallthru
          _
        %s135 = sand.u32 %s40, 1
        %s136 = scalar_lea.sflag [#allocation7], %s135
        %s137 = sand.u32 %s40, 1
        %s138 = smul.addr %s137, 8
        %s139 = scalar_lea.vmem [#allocation6], %s138
        %p140 = pneg %p53
        %p141 = pneg %p50
        %p142 = pneg %p79
        %p143 = pneg %p76
        %s144 = sand.u32 %s66, 1
        %s145 = scalar_lea.sflag [#allocation8], %s144
        %s146 = sand.u32 %s66, 1
        %s147 = scalar_lea.vmem [#allocation9], %s146
        %v148 = vld [vmem:[%s129] sm:$0xff]
        %p149 = scmp.eq.s32.totalorder %s23, 0
        // Predicated region
        $region29: #{tpu_custom_call.1} parent=23 // pred_check
          %p150 = pneg %p149
        $region30: #{tpu_custom_call.1} parent=23 // pred_check_branch
          %152 = sbr.rel (%p150) target = $region32
        $region31: #{tpu_custom_call.1} parent=23 // pred_region
          %vm153 = vcmask 261120
          %154 = vst.msk [vmem:[#allocation2] sm:$0xff] %vm153, 0.0
          %155 = vst.msk [vmem:[#allocation3] sm:$0xff] %vm153, 0.0
          %vm156 = vcmask 253952
          %157 = vst.msk [vmem:[#allocation4] sm:$0x1] %vm156, 0.0
          %158 = vst.msk [vmem:[#allocation5] sm:$0x1] %vm156, %v148
        $region32: #{tpu_custom_call.1} parent=23 // pred_fallthru
          _
        %v159 = vld [vmem:[#allocation5] sm:$0x1]
        %v160 = vmul.f32 %v148, %v148
        %v161 = vld [vmem:[#allocation2] sm:$0xff]
        %v162 = vadd.f32 %v160, 0.0
        %v163 = vadd.f32 %v161, %v162
        %vm164 = vcmask 261120
        %165 = vst.msk [vmem:[#allocation2] sm:$0xff] %vm164, %v163
        %v166 = vrot.slane %v148, 7
        %v167 = vsub.f32 %v148, %v166
        %v168 = vmul.f32 %v167, %v167
        %v169 = vld [vmem:[#allocation3] sm:$0xff]
        %v170 = vadd.f32 %v168, 0.0
        %v171 = vadd.f32 %v169, %v170
        %172 = vst.msk [vmem:[#allocation3] sm:$0xff] %vm164, %v171
        %v174 = vrot.slane %v148, 7
        %v176 = vsub.f32 %v148, %v174
        %v177 = vsub.f32 %v159, %v148
        %v178 = vld [vmem:[#allocation4] sm:$0x1]
        %v179 = vmul.f32 %v177, %v177
        %v180 = vmul.f32 %v176, %v176
        %v181 = vsub.f32 %v179, %v180
        %v182 = vadd.f32 %v178, %v181
        %vm183 = vcmask 253952
        %184 = vst.msk [vmem:[#allocation4] sm:$0x1] %vm183, %v182
        %vm185 = vcmask 261127
        %186 = vst.msk [vmem:[#allocation5 - $0x7] sm:$0x80] %vm185, %v148
        // Predicated region
        $region33: #{tpu_custom_call.1} parent=23 // pred_check
          %p187 = pneg %p149
        $region34: #{tpu_custom_call.1} parent=23 // pred_check_branch
          %189 = sbr.rel (%p187) target = $region36
        $region35: #{tpu_custom_call.1} parent=23 // pred_region
          %v190 = vld [vmem:[#allocation2] sm:$0xff]
          %v191 = vsel %vm164, %v190, 0.0
          %192 = vadd.xlane.f32.xlu0 %v191
          %v193 = vpop.xlane.xlu0 %192
          %v194 = vrot.slane %v193, 4
          %v195 = vadd.f32 %v193, %v194
          %v196 = vrot.slane %v195, 2
          %v197 = vadd.f32 %v195, %v196
          %v198 = vrot.slane %v197, 1
          %v199 = vadd.f32 %v197, %v198
          %s200 = vtos %v199
          %v201 = vld [vmem:[#allocation3] sm:$0xff]
          %v202 = vsel %vm164, %v201, 0.0
          %203 = vadd.xlane.f32.xlu0 %v202
          %v204 = vpop.xlane.xlu0 %203
          %v205 = vrot.slane %v204, 4
          %v206 = vadd.f32 %v204, %v205
          %v207 = vrot.slane %v206, 2
          %v208 = vadd.f32 %v206, %v207
          %v209 = vrot.slane %v208, 1
          %v210 = vadd.f32 %v208, %v209
          %s211 = vtos %v210
          %v212 = vld [vmem:[#allocation4] sm:$0x1]
          %v213 = vsel %vm183, %v212, 0.0
          %214 = vadd.xlane.f32.xlu0 %v213
          %v215 = vpop.xlane.xlu0 %214
          %v216 = vrot.slane %v215, 4
          %v217 = vadd.f32 %v215, %v216
          %v218 = vrot.slane %v217, 2
          %v219 = vadd.f32 %v217, %v218
          %v220 = vrot.slane %v219, 1
          %v221 = vadd.f32 %v219, %v220
          %s222 = vtos %v221
          %s223 = sadd.f32 %s211, %s222
          %v224 = vlaneseq
          %v225 = vand.u32 %v224, 127
          %vm226 = vcmp.eq.s32.totalorder %v225, 0
          %vm227 = vcmp.eq.s32.totalorder %v225, 1
          %v228 = vstv %s223
          %v229 = vsel %vm227, %v228, 0.0
          %v230 = vstv %s200
          %v231 = vsel %vm226, %v230, %v229
          %232 = vst [vmem:[%s147] sm:$0x1] %v231
        $region36: #{tpu_custom_call.1} parent=23 // pred_fallthru
          _
        %s233 = sand.u32 %s66, 1
        %s234 = scalar_lea.sflag [#allocation8], %s233
        %s235 = sand.u32 %s66, 1
        %s236 = scalar_lea.vmem [#allocation9], %s235
        // Predicated region
        $region37: #{tpu_custom_call.1} parent=23 // pred_check
          %p237 = pneg %p76
        $region38: #{tpu_custom_call.1} parent=23 // pred_check_branch
          %239 = sbr.rel (%p237) target = $region40
        $region39: #{tpu_custom_call.1} parent=23 // pred_region
          %241 = vsyncadd %s234, 0
          %s242 = scalar_lea.hbm %s1, %s22
          %s244 = sshll.u32 %s236, 4
          %s245 = int_to_ptr.vmem [resolvable:$true] %s244
          %s246 = sshll.u32 %s242, 4
          %s247 = int_to_ptr.hbm [resolvable:$true] %s246
          %249 = dma.vmem_to_hbm [thread:$0]  %s245, 16, %s247, %s234
        $region40: #{tpu_custom_call.1} parent=23 // pred_fallthru
          _
      $region24: #{tpu_custom_call.1} parent=5 // pred_fallthru
        _
      %p250 = scmp.le.s32.totalorder 2, %s13
      // Predicated region
      $region41: #{tpu_custom_call.1} parent=5 // pred_check
        %p251 = pneg %p250
      $region42: #{tpu_custom_call.1} parent=5 // pred_check_branch
        %253 = sbr.rel (%p251) target = $region44
      $region43: #{tpu_custom_call.1} parent=5 // pred_region
        %s254 = ssub.s32 %s13, 2
        // Predicated region
        $region45: #{tpu_custom_call.1} parent=43 // pred_check
          %p255 = pneg %p82
        $region46: #{tpu_custom_call.1} parent=43 // pred_check_branch
          %257 = sbr.rel (%p255) target = $region48
        $region47: #{tpu_custom_call.1} parent=43 // pred_region
          %s258 = sand.u32 %s67, 1
          %s259 = scalar_lea.sflag [#allocation8], %s258
          %s260 = sand.u32 %s67, 1
          %s261 = scalar_lea.vmem [#allocation9], %s260
          %263 = dma.done %s259, 16
        $region48: #{tpu_custom_call.1} parent=43 // pred_fallthru
          _
      $region44: #{tpu_custom_call.1} parent=5 // pred_fallthru
        _
    $region6: #{tpu_custom_call.1} parent=1 // loop_footer
      %s17 = sadd.s32 1, %s13
    $region7: #{tpu_custom_call.1} parent=1 // loop_footer_branch
      %12 = sbr.rel target = $region3
    $region8: #{tpu_custom_call.1} parent=1 // loop_exit
      _
    %264 = vsyncpa [#allocation7], 1
    %s265 = scalar_lea.sflag [#allocation7], 1
    %266 = vsyncpa %s265, 1
    %267 = vsyncpa [#allocation8], 1
    %s268 = scalar_lea.sflag [#allocation8], 1
    %269 = vsyncpa %s268, 1

</llo_original>
